<compile_context>
chip_gen: v7x
topology: tpu7x:2x2x1
jax: 0.10.0
libtpu: 0.0.40
codegen_flags: <defaults>
</compile_context>

<pallas_src>
import functools

import jax
import jax.numpy as jnp
from jax.experimental import pallas as pl
from jax.experimental.pallas import tpu as pltpu

NEG_SLOPE = 0.01  # F.leaky_relu default negative_slope


def _leaky_relu(x):
    return jnp.where(x > 0, x, NEG_SLOPE * x)


def mlp_kernel(x_ref, w1_ref, b1_ref, w2_ref, b2_ref, o_ref, *, precision=None):
    # Layer 1 on the MXU: (TB, F) @ (F, H) -> (TB, H), f32 accumulation.
    # W1 arrives pre-transposed as (F, H), so this is a plain (K-major RHS)
    # contraction and Mosaic needs no per-step weight relayout.
    h = jax.lax.dot_general(
        x_ref[...], w1_ref[...],
        dimension_numbers=(((1,), (0,)), ((), ())),
        preferred_element_type=jnp.float32,
        precision=precision)
    h = _leaky_relu(h + b1_ref[...])                       # (TB, H), f32

    # Layer 2 (out_features == 1): VPU broadcast-multiply + lane reduction
    # instead of an N=1 MXU matmul.  All in f32 (v5e has no bf16 VPU/EUP).
    y = jnp.sum(h * w2_ref[...], axis=-1)                  # (TB,)
    y = _leaky_relu(y + b2_ref[0])                         # b2 scalar from SMEM

    # Lane-dense store: one (1, TB) row slab per grid step (unmasked vst).
    # TODO(synk): the (TB,) -> (1, TB) relayout is XLU work; it hides under the
    # x DMA at these tile sizes -- restructure layer 2 only if it ever shows on
    # the critical path in a bundle dump.
    o_ref[...] = y.reshape(1, -1).astype(o_ref.dtype)


def network_forward(x, w1, b1, w2, b2, *, block_rows=8192,
                    compute_dtype=None, precision=None):
    """Pallas forward pass of Network(features, hidden).

    x  : (B, F)  float32 or bfloat16  (bf16 input -> bf16 MXU stream, f32 acc)
    w1 : (H, F)  float32   (PyTorch nn.Linear(features, hidden).weight layout)
    b1 : (H,)    float32
    w2 : (1, H)  float32   (PyTorch nn.Linear(hidden, 1).weight layout)
    b2 : (1,)    float32
    returns (B, 1) float32
    """
    x = jnp.asarray(x)
    B, F = x.shape
    H = w1.shape[0]

    # Compute dtype follows x unless overridden; avoid a wrapper-side cast pass
    # over x (it would be a full extra read+write of the only large input).
    if compute_dtype is None:
        compute_dtype = x.dtype if x.dtype in (jnp.bfloat16, jnp.float32) \
            else jnp.float32
    if x.dtype != compute_dtype:
        x = x.astype(compute_dtype)   # only when explicitly requested
    dsize = jnp.dtype(compute_dtype).itemsize

    # ---- batch-tile selection ------------------------------------------
    # Start from the requested tile (multiple of 128 for lane-dense output).
    tb = max(128, (int(block_rows) // 128) * 128)
    # Keep >= ~4 grid steps on large batches so the "parallel" axis shards
    # across both v7x TensorCores.
    tb_4steps = max(128, ((-(-B // 4)) + 127) // 128 * 128)
    tb = min(tb, tb_4steps)
    # Keep the per-step VMEM footprint comfortably under every generation's
    # default scoped-VMEM limit (16 MiB on v5e): double-buffered x tile,
    # h temporary, double-buffered (1, tb) output, plus resident weights.
    per_row_bytes = 2 * F * dsize + H * 4 + 2 * 4
    weight_bytes = 4 * (H * F + 2 * H + 8) * 4
    budget = 12 * 1024 * 1024 - weight_bytes
    tb_vmem = max(128, (budget // per_row_bytes) // 128 * 128)
    tb = min(tb, tb_vmem)

    n_blocks = pl.cdiv(B, tb)
    b_pad = n_blocks * tb     # output is written lane-dense; x is NOT padded

    # Weights: W1 pre-transposed to (F, H) once in the wrapper (tiny array).
    w1_in = jnp.asarray(w1, jnp.float32).T.astype(compute_dtype)   # (F, H)
    b1_in = jnp.asarray(b1, jnp.float32).reshape(1, H)             # f32
    w2_in = jnp.asarray(w2, jnp.float32).reshape(1, H)             # f32
    b2_in = jnp.asarray(b2, jnp.float32).reshape(1)                # scalar

    cost = pl.CostEstimate(
        flops=2 * B * F * H + 4 * B * H,
        transcendentals=0,
        bytes_accessed=B * F * dsize + B * 4 + (H * F) * dsize + 3 * H * 4)

    out = pl.pallas_call(
        functools.partial(mlp_kernel, precision=precision),
        out_shape=jax.ShapeDtypeStruct((1, b_pad), jnp.float32),
        grid=(n_blocks,),
        in_specs=[
            pl.BlockSpec((tb, F), lambda i: (i, 0)),        # x: streamed tiles
            pl.BlockSpec((F, H), lambda i: (0, 0)),         # W1 (F,H): resident
            pl.BlockSpec((1, H), lambda i: (0, 0)),         # b1: resident
            pl.BlockSpec((1, H), lambda i: (0, 0)),         # W2 row: resident
            pl.BlockSpec((1,), lambda i: (0,),
                         memory_space=pltpu.MemorySpace.SMEM),  # b2 scalar
        ],
        out_specs=pl.BlockSpec((1, tb), lambda i: (0, i)),  # lane-dense slab
        compiler_params=pltpu.CompilerParams(
            dimension_semantics=("parallel",)),
        cost_estimate=cost,
    )(x, w1_in, b1_in, w2_in, b2_in)

    # (1, B_pad) -> (B, 1); drop the (garbage) tail lanes of the ragged block.
    return out.reshape(-1)[:B].reshape(B, 1)


def network_forward_ref(x, w1, b1, w2, b2):
    """Plain-JAX reference mirroring the PyTorch forward."""
    h = jnp.dot(jnp.asarray(x, jnp.float32), w1.T) + b1
    h = jnp.where(h > 0, h, NEG_SLOPE * h)
    y = jnp.dot(h, w2.T) + b2
    y = jnp.where(y > 0, y, NEG_SLOPE * y)
    return y


if __name__ == "__main__":
    # Small shapes consistent with Network(features, hidden_layer).
    batch, features, hidden = 300, 32, 64

    key = jax.random.PRNGKey(0)
    kx, kw1, kb1, kw2, kb2 = jax.random.split(key, 5)

    x = jax.random.normal(kx, (batch, features), dtype=jnp.float32)

    # Deterministic parameter init (uniform like PyTorch Linear default bounds).
    bound1 = 1.0 / (features ** 0.5)
    w1 = jax.random.uniform(kw1, (hidden, features), jnp.float32, -bound1, bound1)
    b1 = jax.random.uniform(kb1, (hidden,), jnp.float32, -bound1, bound1)
    bound2 = 1.0 / (hidden ** 0.5)
    w2 = jax.random.uniform(kw2, (1, hidden), jnp.float32, -bound2, bound2)
    b2 = jax.random.uniform(kb2, (1,), jnp.float32, -bound2, bound2)

    ref = network_forward_ref(x, w1, b1, w2, b2)

    # f32 path.  With batch=300 the tile clips to 128 rows -> a 3-step grid
    # with a ragged last x block (exercises streaming + Pallas block padding +
    # lane-dense writeback).
    out = jax.block_until_ready(network_forward(x, w1, b1, w2, b2))
    assert out.shape == (batch, 1), out.shape
    # Modest tolerance: the default-precision f32 MXU matmul may use reduced-
    # precision passes (pass precision=jax.lax.Precision.HIGHEST for parity).
    assert jnp.allclose(out, ref, atol=1e-2, rtol=1e-2), "f32 mismatch vs reference"

    # bf16 path: x already lives in HBM as bf16, so the kernel streams half the
    # bytes with no extra wrapper-side cast pass (f32 accumulation on the MXU).
    x_bf16 = x.astype(jnp.bfloat16)
    out_bf16 = jax.block_until_ready(network_forward(x_bf16, w1, b1, w2, b2))
    assert out_bf16.shape == (batch, 1), out_bf16.shape
    assert jnp.allclose(out_bf16, ref, atol=5e-2, rtol=5e-2), "bf16 mismatch vs reference"

    print("KERNEL_OK")
</pallas_src>

<mosaic_0001>
module attributes {stable_mosaic.version = 11 : i64} {
  func.func @mlp_kernel(%arg0: i32, %arg1: memref<128x32xf32, #tpu.memory_space<vmem>>, %arg2: memref<32x64xf32, #tpu.memory_space<vmem>>, %arg3: memref<1x64xf32, #tpu.memory_space<vmem>>, %arg4: memref<1x64xf32, #tpu.memory_space<vmem>>, %arg5: memref<1xf32, #tpu.memory_space<smem>>, %arg6: memref<1x128xf32, #tpu.memory_space<vmem>>) attributes {dimension_semantics = [#tpu.dimension_semantics<parallel>], iteration_bounds = array<i64: 3>, scalar_prefetch = 0 : i64, scratch_operands = 0 : i64, tpu.core_type = #tpu.core_type<tc>, window_params = [{transform_indices = @transform_0, window_bounds = array<i64: 128, 32>}, {pipeline_mode = #tpu.pipeline_mode<synchronous>, transform_indices = @transform_1, window_bounds = array<i64: 32, 64>}, {pipeline_mode = #tpu.pipeline_mode<synchronous>, transform_indices = @transform_2, window_bounds = array<i64: 1, 64>}, {pipeline_mode = #tpu.pipeline_mode<synchronous>, transform_indices = @transform_3, window_bounds = array<i64: 1, 64>}, {transform_indices = @transform_4, window_bounds = array<i64: 1>}, {transform_indices = @transform_5, window_bounds = array<i64: 1, 128>}]} {
    %c0 = arith.constant 0 : index
    %c0_0 = arith.constant 0 : index
    %0 = vector.load %arg1[%c0, %c0_0] : memref<128x32xf32, #tpu.memory_space<vmem>>, vector<128x32xf32>
    %c0_1 = arith.constant 0 : index
    %c0_2 = arith.constant 0 : index
    %1 = vector.load %arg2[%c0_1, %c0_2] : memref<32x64xf32, #tpu.memory_space<vmem>>, vector<32x64xf32>
    %cst = arith.constant dense<0.000000e+00> : vector<128x64xf32>
    %2 = tpu.matmul %0, %1, %cst {dimension_numbers = #tpu.dot_dimension_numbers<[1], [0], [0], [1], [0, 0, 1, 1], [], []>} : vector<128x32xf32>, vector<32x64xf32>, vector<128x64xf32> -> vector<128x64xf32>
    %c0_3 = arith.constant 0 : index
    %c0_4 = arith.constant 0 : index
    %3 = vector.load %arg3[%c0_3, %c0_4] : memref<1x64xf32, #tpu.memory_space<vmem>>, vector<1x64xf32>
    %4 = vector.broadcast %3 : vector<1x64xf32> to vector<128x64xf32>
    %5 = arith.addf %2, %4 : vector<128x64xf32>
    %cst_5 = arith.constant 0.000000e+00 : f32
    %6 = vector.broadcast %cst_5 : f32 to vector<128x64xf32>
    %7 = arith.cmpf ogt, %5, %6 : vector<128x64xf32>
    %cst_6 = arith.constant 0.00999999977 : f32
    %8 = vector.broadcast %cst_6 : f32 to vector<128x64xf32>
    %9 = arith.mulf %8, %5 : vector<128x64xf32>
    %10 = arith.select %7, %5, %9 : vector<128x64xi1>, vector<128x64xf32>
    %c0_7 = arith.constant 0 : index
    %c0_8 = arith.constant 0 : index
    %11 = vector.load %arg4[%c0_7, %c0_8] : memref<1x64xf32, #tpu.memory_space<vmem>>, vector<1x64xf32>
    %12 = vector.broadcast %11 : vector<1x64xf32> to vector<128x64xf32>
    %13 = arith.mulf %10, %12 : vector<128x64xf32>
    %cst_9 = arith.constant dense<0.000000e+00> : vector<128xf32>
    %14 = vector.multi_reduction <add>, %13, %cst_9 [1] : vector<128x64xf32> to vector<128xf32>
    %c0_10 = arith.constant 0 : index
    %15 = memref.load %arg5[%c0_10] : memref<1xf32, #tpu.memory_space<smem>>
    %16 = vector.broadcast %15 : f32 to vector<128xf32>
    %17 = arith.addf %14, %16 : vector<128xf32>
    %cst_11 = arith.constant 0.000000e+00 : f32
    %18 = vector.broadcast %cst_11 : f32 to vector<128xf32>
    %19 = arith.cmpf ogt, %17, %18 : vector<128xf32>
    %cst_12 = arith.constant 0.00999999977 : f32
    %20 = vector.broadcast %cst_12 : f32 to vector<128xf32>
    %21 = arith.mulf %20, %17 : vector<128xf32>
    %22 = arith.select %19, %17, %21 : vector<128xi1>, vector<128xf32>
    %23 = vector.shape_cast %22 : vector<128xf32> to vector<1x128xf32>
    %c0_13 = arith.constant 0 : index
    %c0_14 = arith.constant 0 : index
    %24 = vector.load %arg6[%c0_13, %c0_14] : memref<1x128xf32, #tpu.memory_space<vmem>>, vector<1x128xf32>
    tpu.vector_store %arg6[%c0_13, %c0_14], %23 {strides = array<i32>} : memref<1x128xf32, #tpu.memory_space<vmem>>, vector<1x128xf32>,
    return
  }
  func.func @transform_0(%arg0: i32) -> (i32, i32) {
    %c0_i32 = arith.constant 0 : i32
    %c0_i32_0 = arith.constant 0 : i32
    return %arg0, %c0_i32 : i32, i32
  }
  func.func @transform_1(%arg0: i32) -> (i32, i32) {
    %c0_i32 = arith.constant 0 : i32
    %c0_i32_0 = arith.constant 0 : i32
    %c0_i32_1 = arith.constant 0 : i32
    return %c0_i32, %c0_i32_0 : i32, i32
  }
  func.func @transform_2(%arg0: i32) -> (i32, i32) {
    %c0_i32 = arith.constant 0 : i32
    %c0_i32_0 = arith.constant 0 : i32
    %c0_i32_1 = arith.constant 0 : i32
    return %c0_i32, %c0_i32_0 : i32, i32
  }
  func.func @transform_3(%arg0: i32) -> (i32, i32) {
    %c0_i32 = arith.constant 0 : i32
    %c0_i32_0 = arith.constant 0 : i32
    %c0_i32_1 = arith.constant 0 : i32
    return %c0_i32, %c0_i32_0 : i32, i32
  }
  func.func @transform_4(%arg0: i32) -> i32 {
    %c0_i32 = arith.constant 0 : i32
    %c0_i32_0 = arith.constant 0 : i32
    return %c0_i32 : i32
  }
  func.func @transform_5(%arg0: i32) -> (i32, i32) {
    %c0_i32 = arith.constant 0 : i32
    %c0_i32_0 = arith.constant 0 : i32
    return %c0_i32, %arg0 : i32, i32
  }
}

</mosaic_0001>

<llo_original>
// kernel: tpu_custom_call.1
$region0: #{tpu_custom_call.1}
  #allocation0 [shape = 'u32[]', space=smem, size = 0x4, offset = 0x4, fixed_abs, tag = 'smem constant byte address 0x4 - core index']
  #allocation1 [shape = 'u32[144,128]{1,0:T(1,128)}', space=vmem, size = 0x12000, scoped, tag = 'internal scratch']
  #allocation2 [shape = 'f32[1]{0:T(128)S(6)}', space=smem, size = 0x200, scoped, tag = 'scoped memory for tpu_custom_call.1']
  %s0 = inlined_call_operand.vmem [shape: f32[300,32], index: 0, kind: input, shape index: {}]
  %s1 = inlined_call_operand.vmem [shape: f32[32,64], index: 1, kind: input, shape index: {}]
  %s2 = inlined_call_operand.vmem [shape: f32[1,64], index: 2, kind: input, shape index: {}]
  %s3 = inlined_call_operand.vmem [shape: f32[1,64], index: 3, kind: input, shape index: {}]
  %s4 = inlined_call_operand.<no memory space> [shape: f32[1], index: 4, kind: input, shape index: {}]
  %s5 = inlined_call_operand.hbm [shape: f32[1,384], index: 5, kind: output, shape index: {}]
  %s6 = sld [smem:[#allocation0]]
  $region53: #{tpu_custom_call.1} parent=0
    _
  %s8 = ssub.s32 1, %s6
  %s9 = scalar_select 0, %s8, %s6
  %10 = sst [smem:[#allocation2]] %s4
  $region1: #{tpu_custom_call.1} parent=0
    #allocation3 [shape = 'u8[1024]{0}', space=vmem, size = 0x400, scoped, tag = 'output window, operand 0']
    #allocation4 [shape = 's32[2]{0}', space=sflag, size = 0x8, scoped, tag = 'scoped memory for tpu_custom_call.1']
    %11 = vsyncpa [#allocation4], 0
    %s12 = scalar_lea.sflag [#allocation4], 1
    %13 = vsyncpa %s12, 0
    loop: start=0, step=1, limit=5
    $region2: #{tpu_custom_call.1} parent=1 // loop_pre_header
      _
    $region3: #{tpu_custom_call.1} parent=1 // loop_header
      %s15 = sphi 0, %s19
      %p16 = scmp.ge.s32.totalorder %s15, 5
      %s25 = sphi 0, %s27
      %s28 = sphi 0, %s25
      %s29 = sphi 0, %s28
      %s45 = sphi 0, %s29
      %s49 = sphi 0, %s49
      %s51 = sphi 0, %s49
      %s52 = sphi 0, %s51
      %s66 = sphi 0, %s52
      %s70 = sphi 0, %s70
      %s72 = sphi 0, %s70
      %s73 = sphi 0, %s72
      %s87 = sphi 0, %s73
      %s91 = sphi 0, %s91
      %s93 = sphi 0, %s91
      %s94 = sphi 0, %s93
      %s108 = sphi 0, %s94
      %s112 = sphi 0, %s112
      %s114 = sphi 0, %s112
      %s115 = sphi 0, %s114
      %s129 = sphi 0, %s115
      %s135 = sphi 0, %s137
      %s138 = sphi 0, %s135
      %s139 = sphi 0, %s138
      %s155 = sphi 0, %s139
    $region4: #{tpu_custom_call.1} parent=1 // loop_header_branch
      %18 = sbr.rel (%p16) target = $region8
    $region5: #{tpu_custom_call.1} parent=1 // loop_body
      %s20 = ssub.s32 %s15, 1
      %s21 = ssub.s32 %s15, 2
      %s22 = sadd.s32 %s15, 1
      %s23 = ssub.s32 %s15, %s22
      %p24 = scmp.eq.s32.totalorder %s23, 0
      %s26 = sadd.s32 %s25, 1
      %s27 = scalar_select %p24, %s25, %s26
      %p30 = pneg %p24
      %p31 = scmp.eq.s32.totalorder %s15, 2
      %p32 = por %p30, %p31
      %p33 = scmp.ne.s32.totalorder %s25, %s28
      %p34 = scmp.eq.s32.totalorder %s15, 0
      %p35 = por %p33, %p34
      %p36 = scmp.ne.s32.totalorder %s25, %s28
      %p37 = scmp.eq.s32.totalorder %s20, 2
      %p38 = por %p36, %p37
      %p39 = scmp.ne.s32.totalorder %s28, %s29
      %p40 = scmp.eq.s32.totalorder %s20, 0
      %p41 = por %p39, %p40
      %p42 = scmp.ne.s32.totalorder %s28, %s29
      %p43 = scmp.eq.s32.totalorder %s21, 2
      %p44 = por %p42, %p43
      %p46 = scmp.ne.s32.totalorder %s29, %s45
      %p47 = scmp.eq.s32.totalorder %s21, 0
      %p48 = por %p46, %p47
      %s50 = sadd.s32 %s49, 1
      %p53 = scmp.eq.s32.totalorder %s15, 2
      %p54 = scmp.ne.s32.totalorder %s49, %s51
      %p55 = scmp.eq.s32.totalorder %s15, 0
      %p56 = por %p54, %p55
      %p57 = scmp.ne.s32.totalorder %s49, %s51
      %p58 = scmp.eq.s32.totalorder %s20, 2
      %p59 = por %p57, %p58
      %p60 = scmp.ne.s32.totalorder %s51, %s52
      %p61 = scmp.eq.s32.totalorder %s20, 0
      %p62 = por %p60, %p61
      %p63 = scmp.ne.s32.totalorder %s51, %s52
      %p64 = scmp.eq.s32.totalorder %s21, 2
      %p65 = por %p63, %p64
      %p67 = scmp.ne.s32.totalorder %s52, %s66
      %p68 = scmp.eq.s32.totalorder %s21, 0
      %p69 = por %p67, %p68
      %s71 = sadd.s32 %s70, 1
      %p74 = scmp.eq.s32.totalorder %s15, 2
      %p75 = scmp.ne.s32.totalorder %s70, %s72
      %p76 = scmp.eq.s32.totalorder %s15, 0
      %p77 = por %p75, %p76
      %p78 = scmp.ne.s32.totalorder %s70, %s72
      %p79 = scmp.eq.s32.totalorder %s20, 2
      %p80 = por %p78, %p79
      %p81 = scmp.ne.s32.totalorder %s72, %s73
      %p82 = scmp.eq.s32.totalorder %s20, 0
      %p83 = por %p81, %p82
      %p84 = scmp.ne.s32.totalorder %s72, %s73
      %p85 = scmp.eq.s32.totalorder %s21, 2
      %p86 = por %p84, %p85
      %p88 = scmp.ne.s32.totalorder %s73, %s87
      %p89 = scmp.eq.s32.totalorder %s21, 0
      %p90 = por %p88, %p89
      %s92 = sadd.s32 %s91, 1
      %p95 = scmp.eq.s32.totalorder %s15, 2
      %p96 = scmp.ne.s32.totalorder %s91, %s93
      %p97 = scmp.eq.s32.totalorder %s15, 0
      %p98 = por %p96, %p97
      %p99 = scmp.ne.s32.totalorder %s91, %s93
      %p100 = scmp.eq.s32.totalorder %s20, 2
      %p101 = por %p99, %p100
      %p102 = scmp.ne.s32.totalorder %s93, %s94
      %p103 = scmp.eq.s32.totalorder %s20, 0
      %p104 = por %p102, %p103
      %p105 = scmp.ne.s32.totalorder %s93, %s94
      %p106 = scmp.eq.s32.totalorder %s21, 2
      %p107 = por %p105, %p106
      %p109 = scmp.ne.s32.totalorder %s94, %s108
      %p110 = scmp.eq.s32.totalorder %s21, 0
      %p111 = por %p109, %p110
      %s113 = sadd.s32 %s112, 1
      %p116 = scmp.eq.s32.totalorder %s15, 2
      %p117 = scmp.ne.s32.totalorder %s112, %s114
      %p118 = scmp.eq.s32.totalorder %s15, 0
      %p119 = por %p117, %p118
      %p120 = scmp.ne.s32.totalorder %s112, %s114
      %p121 = scmp.eq.s32.totalorder %s20, 2
      %p122 = por %p120, %p121
      %p123 = scmp.ne.s32.totalorder %s114, %s115
      %p124 = scmp.eq.s32.totalorder %s20, 0
      %p125 = por %p123, %p124
      %p126 = scmp.ne.s32.totalorder %s114, %s115
      %p127 = scmp.eq.s32.totalorder %s21, 2
      %p128 = por %p126, %p127
      %p130 = scmp.ne.s32.totalorder %s115, %s129
      %p131 = scmp.eq.s32.totalorder %s21, 0
      %p132 = por %p130, %p131
      %s133 = ssub.s32 %s15, %s22
      %p134 = scmp.eq.s32.totalorder %s133, 0
      %s136 = sadd.s32 %s135, 1
      %s137 = scalar_select %p134, %s135, %s136
      %p140 = pneg %p134
      %p141 = scmp.eq.s32.totalorder %s15, 2
      %p142 = por %p140, %p141
      %p143 = scmp.ne.s32.totalorder %s135, %s138
      %p144 = scmp.eq.s32.totalorder %s15, 0
      %p145 = por %p143, %p144
      %p146 = scmp.ne.s32.totalorder %s135, %s138
      %p147 = scmp.eq.s32.totalorder %s20, 2
      %p148 = por %p146, %p147
      %p149 = scmp.ne.s32.totalorder %s138, %s139
      %p150 = scmp.eq.s32.totalorder %s20, 0
      %p151 = por %p149, %p150
      %p152 = scmp.ne.s32.totalorder %s138, %s139
      %p153 = scmp.eq.s32.totalorder %s21, 2
      %p154 = por %p152, %p153
      %p156 = scmp.ne.s32.totalorder %s139, %s155
      %p157 = scmp.eq.s32.totalorder %s21, 0
      %p158 = por %p156, %p157
      %p159 = scmp.le.s32.totalorder 1, %s15
      %p160 = scmp.lt.s32.totalorder %s15, 4
      %p161 = pnand %p159, %p160
      %p162 = pneg %p161
      // Predicated region
      $region9: #{tpu_custom_call.1} parent=5 // pred_check
        _
      $region10: #{tpu_custom_call.1} parent=5 // pred_check_branch
        %164 = sbr.rel (%p161) target = $region12
      $region11: #{tpu_custom_call.1} parent=5 // pred_region
        %s165 = ssub.s32 %s15, 1
        // Predicated region
        $region13: #{tpu_custom_call.1} parent=11 // pred_check
          %p166 = pneg %p62
        $region14: #{tpu_custom_call.1} parent=11 // pred_check_branch
          %168 = sbr.rel (%p166) target = $region16
        $region15: #{tpu_custom_call.1} parent=11 // pred_region
          _
        $region16: #{tpu_custom_call.1} parent=11 // pred_fallthru
          _
        // Predicated region
        $region17: #{tpu_custom_call.1} parent=11 // pred_check
          %p169 = pneg %p83
        $region18: #{tpu_custom_call.1} parent=11 // pred_check_branch
          %171 = sbr.rel (%p169) target = $region20
        $region19: #{tpu_custom_call.1} parent=11 // pred_region
          _
        $region20: #{tpu_custom_call.1} parent=11 // pred_fallthru
          _
        // Predicated region
        $region21: #{tpu_custom_call.1} parent=11 // pred_check
          %p172 = pneg %p104
        $region22: #{tpu_custom_call.1} parent=11 // pred_check_branch
          %174 = sbr.rel (%p172) target = $region24
        $region23: #{tpu_custom_call.1} parent=11 // pred_region
          _
        $region24: #{tpu_custom_call.1} parent=11 // pred_fallthru
          _
        // Predicated region
        $region25: #{tpu_custom_call.1} parent=11 // pred_check
          %p175 = pneg %p125
        $region26: #{tpu_custom_call.1} parent=11 // pred_check_branch
          %177 = sbr.rel (%p175) target = $region28
        $region27: #{tpu_custom_call.1} parent=11 // pred_region
          _
        $region28: #{tpu_custom_call.1} parent=11 // pred_fallthru
          _
      $region12: #{tpu_custom_call.1} parent=5 // pred_fallthru
        _
      %p178 = scmp.lt.s32.totalorder %s15, 3
      // Predicated region
      $region29: #{tpu_custom_call.1} parent=5 // pred_check
        %p179 = pneg %p178
      $region30: #{tpu_custom_call.1} parent=5 // pred_check_branch
        %181 = sbr.rel (%p179) target = $region32
      $region31: #{tpu_custom_call.1} parent=5 // pred_region
        // Predicated region
        $region33: #{tpu_custom_call.1} parent=31 // pred_check
          %p182 = pneg %p35
        $region34: #{tpu_custom_call.1} parent=31 // pred_check_branch
          %184 = sbr.rel (%p182) target = $region36
        $region35: #{tpu_custom_call.1} parent=31 // pred_region
          %s185 = smul.u32 16, %s15
          %s186 = ssub.s32 38, %s185
          %p187 = scmp.lt.s32.totalorder %s186, 16
          %s188 = scalar_select %p187, %s186, 16
          %s189 = smul.u32 128, %s188
          %p190 = scmp.lt.s32.totalorder %s185, 37
          %s191 = scalar_select %p190, %s185, 37
          %s192 = smul.addr %s191, 8
          %s193 = scalar_lea.vmem %s0, %s192
          %s194 = smul.u32 16, %s15
          %s195 = ssub.s32 38, %s194
          %p196 = scmp.lt.s32.totalorder %s195, 16
          %s197 = scalar_select %p196, %s195, 16
          %s198 = smul.u32 128, %s197
        $region36: #{tpu_custom_call.1} parent=31 // pred_fallthru
          _
      $region32: #{tpu_custom_call.1} parent=5 // pred_fallthru
        _
      %p199 = scmp.le.s32.totalorder 1, %s15
      %p200 = scmp.lt.s32.totalorder %s15, 4
      %p201 = pnand %p199, %p200
      %p202 = pneg %p201
      // Predicated region
      $region37: #{tpu_custom_call.1} parent=5 // pred_check
        _
      $region38: #{tpu_custom_call.1} parent=5 // pred_check_branch
        %204 = sbr.rel (%p201) target = $region40
      $region39: #{tpu_custom_call.1} parent=5 // pred_region
        %s205 = ssub.s32 %s15, 1
        %s206 = smul.u32 16, %s20
        %s207 = ssub.s32 38, %s206
        %p208 = scmp.lt.s32.totalorder %s207, 16
        %s209 = scalar_select %p208, %s207, 16
        %s210 = smul.u32 128, %s209
        %p211 = scmp.lt.s32.totalorder %s206, 37
        %s212 = scalar_select %p211, %s206, 37
        %s213 = smul.addr %s212, 8
        %s214 = scalar_lea.vmem %s0, %s213
        %p215 = pneg %p41
        %p216 = pneg %p38
        %p217 = pneg %p62
        %p218 = pneg %p59
        %p219 = pneg %p83
        %p220 = pneg %p80
        %p221 = pneg %p104
        %p222 = pneg %p101
        %p223 = pneg %p125
        %p224 = pneg %p122
        %p225 = pneg %p151
        %p226 = pneg %p148
        %s227 = sand.u32 %s138, 1
        %s228 = scalar_lea.sflag [#allocation4], %s227
        %s229 = sand.u32 %s138, 1
        %s230 = scalar_lea.vmem [#allocation3], %s229
        %s231 = smul.u32 16, %s20
        %s232 = ssub.s32 38, %s231
        %p233 = scmp.lt.s32.totalorder %s232, 16
        %s234 = scalar_select %p233, %s232, 16
        %s235 = smul.u32 128, %s234
        %p236 = scmp.lt.s32.totalorder %s231, 37
        %s237 = scalar_select %p236, %s231, 37
        %s238 = smul.addr %s237, 8
        %s239 = scalar_lea.vmem %s0, %s238
        %s240 = smul.u32 16, %s20
        %s241 = ssub.s32 38, %s240
        %p242 = scmp.lt.s32.totalorder %s241, 16
        %s243 = scalar_select %p242, %s241, 16
        %s244 = smul.u32 128, %s243
        %v245 = vld [vmem:[%s239] sm:$0xff]
        %v246 = vld [vmem:[%s239 + $0x8] sm:$0xff]
        %v247 = vld [vmem:[%s239 + $0x10] sm:$0xff]
        %v248 = vld [vmem:[%s239 + $0x18] sm:$0xff]
        %v249 = vld [vmem:[%s239 + $0x20] sm:$0xff]
        %v250 = vld [vmem:[%s239 + $0x28] sm:$0xff]
        %v251 = vld [vmem:[%s239 + $0x30] sm:$0xff]
        %v252 = vld [vmem:[%s239 + $0x38] sm:$0xff]
        %v253 = vld [vmem:[%s239 + $0x40] sm:$0xff]
        %v254 = vld [vmem:[%s239 + $0x48] sm:$0xff]
        %v255 = vld [vmem:[%s239 + $0x50] sm:$0xff]
        %v256 = vld [vmem:[%s239 + $0x58] sm:$0xff]
        %v257 = vld [vmem:[%s239 + $0x60] sm:$0xff]
        %v258 = vld [vmem:[%s239 + $0x68] sm:$0xff]
        %v259 = vld [vmem:[%s239 + $0x70] sm:$0xff]
        %v260 = vld [vmem:[%s239 + $0x78] sm:$0xff]
        %v261 = vld [vmem:[%s1] sm:$0xff]
        %v262 = vld [vmem:[%s1 + $0x8] sm:$0xff]
        %v263 = vld [vmem:[%s1 + $0x10] sm:$0xff]
        %v264 = vld [vmem:[%s1 + $0x18] sm:$0xff]
        %v265 = vld [vmem:[%s2] sm:$0x1]
        %v267 = vlaneseq
        %v268 = vshrl.u32 %v267, 7
        %v269 = vsub.s32 0, %v268
        %v270 = vrot.slane %v265, %v269
        %vm272 = vcmask 261120
        %v274 = vsel %vm272, %v245, 0
        %v277 = vsel %vm272, %v246, 0
        %v280 = vsel %vm272, %v247, 0
        %v283 = vsel %vm272, %v248, 0
        %v286 = vsel %vm272, %v249, 0
        %v289 = vsel %vm272, %v250, 0
        %v292 = vsel %vm272, %v251, 0
        %v295 = vsel %vm272, %v252, 0
        %v298 = vsel %vm272, %v253, 0
        %v301 = vsel %vm272, %v254, 0
        %v304 = vsel %vm272, %v255, 0
        %v307 = vsel %vm272, %v256, 0
        %v310 = vsel %vm272, %v257, 0
        %v313 = vsel %vm272, %v258, 0
        %v316 = vsel %vm272, %v259, 0
        %v319 = vsel %vm272, %v260, 0
        %321 = vmatprep.subr.mxu0 0.0
        %322 = vmatpush1.msra.mxu0 %v261
        %323 = vmatprep.subr.mxu0 0.0
        %324 = vmatpush1.msra.mxu0 %v262
        %325 = vmatprep.subr.mxu0 0.0
        %326 = vmatpush1.msra.mxu0 %v263
        %327 = vmatprep.subr.mxu0 0.0
        %328 = vmatpush1.msra.mxu0 %v264
        %329 = vmatprep.subr.mxu0 0.0
        %330 = vmatpush1.msra.mxu0 0.0
        %331 = vmatprep.subr.mxu0 0.0
        %332 = vmatpush1.msra.mxu0 0.0
        %333 = vmatprep.subr.mxu0 0.0
        %334 = vmatpush1.msra.mxu0 0.0
        %335 = vmatprep.subr.mxu0 0.0
        %336 = vmatpush1.msra.mxu0 0.0
        %337 = vmatprep.subr.mxu0 0.0
        %338 = vmatpush1.msra.mxu0 0.0
        %339 = vmatprep.subr.mxu0 0.0
        %340 = vmatpush1.msra.mxu0 0.0
        %341 = vmatprep.subr.mxu0 0.0
        %342 = vmatpush1.msra.mxu0 0.0
        %343 = vmatprep.subr.mxu0 0.0
        %344 = vmatpush1.msra.mxu0 0.0
        %345 = vmatprep.subr.mxu0 0.0
        %346 = vmatpush1.msra.mxu0 0.0
        %347 = vmatprep.subr.mxu0 0.0
        %348 = vmatpush1.msra.mxu0 0.0
        %349 = vmatprep.subr.mxu0 0.0
        %350 = vmatpush1.msra.mxu0 0.0
        %351 = vmatprep.subr.mxu0 0.0
        %352 = vmatpush1.msra.mxu0 0.0
        %353 = vmatprep.subr.mxu0 0.0
        %354 = vmatpush1.msra.mxu0 0.0
        %355 = vmatprep.subr.mxu0 0.0
        %356 = vmatpush1.msra.mxu0 0.0
        %357 = vmatprep.subr.mxu0 0.0
        %358 = vmatpush1.msra.mxu0 0.0
        %359 = vmatprep.subr.mxu0 0.0
        %360 = vmatpush1.msra.mxu0 0.0
        %361 = vmatprep.subr.mxu0 0.0
        %362 = vmatpush1.msra.mxu0 0.0
        %363 = vmatprep.subr.mxu0 0.0
        %364 = vmatpush1.msra.mxu0 0.0
        %365 = vmatprep.subr.mxu0 0.0
        %366 = vmatpush1.msra.mxu0 0.0
        %367 = vmatprep.subr.mxu0 0.0
        %368 = vmatpush1.msra.mxu0 0.0
        %369 = vmatprep.subr.mxu0 0.0
        %370 = vmatpush1.msra.mxu0 0.0
        %371 = vmatprep.subr.mxu0 0.0
        %372 = vmatpush1.msra.mxu0 0.0
        %373 = vmatprep.subr.mxu0 0.0
        %374 = vmatpush1.msra.mxu0 0.0
        %375 = vmatprep.subr.mxu0 0.0
        %376 = vmatpush1.msra.mxu0 0.0
        %377 = vmatprep.subr.mxu0 0.0
        %378 = vmatpush1.msra.mxu0 0.0
        %379 = vmatprep.subr.mxu0 0.0
        %380 = vmatpush1.msra.mxu0 0.0
        %381 = vmatprep.subr.mxu0 0.0
        %382 = vmatpush1.msra.mxu0 0.0
        %383 = vmatprep.subr.mxu0 0.0
        %384 = vmatpush1.msra.mxu0 0.0
        %385 = vmatprep.mubr.f32.mxu0 0.0
        %386 = vmatmul.mubr.f32.gmra.mrb[0].mxu0 %v274
        %v387 = vpop.f32.mrb[0].mxu0
        %v388 = vadd.f32 %v270, %v387
        %v389 = vpop.f32.mrb[0].mxu0
        %390 = vmatprep.mubr.f32.mxu0 0.0
        %391 = vmatmul.mubr.f32.gmra.mrb[0].mxu0 %v277
        %v392 = vpop.f32.mrb[0].mxu0
        %v393 = vadd.f32 %v270, %v392
        %v394 = vpop.f32.mrb[0].mxu0
        %395 = vmatprep.mubr.f32.mxu0 0.0
        %396 = vmatmul.mubr.f32.gmra.mrb[0].mxu0 %v280
        %v397 = vpop.f32.mrb[0].mxu0
        %v398 = vadd.f32 %v270, %v397
        %v399 = vpop.f32.mrb[0].mxu0
        %400 = vmatprep.mubr.f32.mxu0 0.0
        %401 = vmatmul.mubr.f32.gmra.mrb[0].mxu0 %v283
        %v402 = vpop.f32.mrb[0].mxu0
        %v403 = vadd.f32 %v270, %v402
        %v404 = vpop.f32.mrb[0].mxu0
        %405 = vmatprep.mubr.f32.mxu0 0.0
        %406 = vmatmul.mubr.f32.gmra.mrb[0].mxu0 %v286
        %v407 = vpop.f32.mrb[0].mxu0
        %v408 = vadd.f32 %v270, %v407
        %v409 = vpop.f32.mrb[0].mxu0
        %410 = vmatprep.mubr.f32.mxu0 0.0
        %411 = vmatmul.mubr.f32.gmra.mrb[0].mxu0 %v289
        %v412 = vpop.f32.mrb[0].mxu0
        %v413 = vadd.f32 %v270, %v412
        %v414 = vpop.f32.mrb[0].mxu0
        %415 = vmatprep.mubr.f32.mxu0 0.0
        %416 = vmatmul.mubr.f32.gmra.mrb[0].mxu0 %v292
        %v417 = vpop.f32.mrb[0].mxu0
        %v418 = vadd.f32 %v270, %v417
        %v419 = vpop.f32.mrb[0].mxu0
        %420 = vmatprep.mubr.f32.mxu0 0.0
        %421 = vmatmul.mubr.f32.gmra.mrb[0].mxu0 %v295
        %v422 = vpop.f32.mrb[0].mxu0
        %v423 = vadd.f32 %v270, %v422
        %v424 = vpop.f32.mrb[0].mxu0
        %425 = vmatprep.mubr.f32.mxu0 0.0
        %426 = vmatmul.mubr.f32.gmra.mrb[0].mxu0 %v298
        %v427 = vpop.f32.mrb[0].mxu0
        %v428 = vadd.f32 %v270, %v427
        %v429 = vpop.f32.mrb[0].mxu0
        %430 = vmatprep.mubr.f32.mxu0 0.0
        %431 = vmatmul.mubr.f32.gmra.mrb[0].mxu0 %v301
        %v432 = vpop.f32.mrb[0].mxu0
        %v433 = vadd.f32 %v270, %v432
        %v434 = vpop.f32.mrb[0].mxu0
        %435 = vmatprep.mubr.f32.mxu0 0.0
        %436 = vmatmul.mubr.f32.gmra.mrb[0].mxu0 %v304
        %v437 = vpop.f32.mrb[0].mxu0
        %v438 = vadd.f32 %v270, %v437
        %v439 = vpop.f32.mrb[0].mxu0
        %440 = vmatprep.mubr.f32.mxu0 0.0
        %441 = vmatmul.mubr.f32.gmra.mrb[0].mxu0 %v307
        %v442 = vpop.f32.mrb[0].mxu0
        %v443 = vadd.f32 %v270, %v442
        %v444 = vpop.f32.mrb[0].mxu0
        %445 = vmatprep.mubr.f32.mxu0 0.0
        %446 = vmatmul.mubr.f32.gmra.mrb[0].mxu0 %v310
        %v447 = vpop.f32.mrb[0].mxu0
        %v448 = vadd.f32 %v270, %v447
        %v449 = vpop.f32.mrb[0].mxu0
        %450 = vmatprep.mubr.f32.mxu0 0.0
        %451 = vmatmul.mubr.f32.gmra.mrb[0].mxu0 %v313
        %v452 = vpop.f32.mrb[0].mxu0
        %v453 = vadd.f32 %v270, %v452
        %v454 = vpop.f32.mrb[0].mxu0
        %455 = vmatprep.mubr.f32.mxu0 0.0
        %456 = vmatmul.mubr.f32.gmra.mrb[0].mxu0 %v316
        %v457 = vpop.f32.mrb[0].mxu0
        %v458 = vadd.f32 %v270, %v457
        %v459 = vpop.f32.mrb[0].mxu0
        %460 = vmatprep.mubr.f32.mxu0 0.0
        %461 = vmatmul.mubr.f32.gmra.mrb[0].mxu0 %v319
        %v462 = vpop.f32.mrb[0].mxu0
        %v463 = vadd.f32 %v270, %v462
        %v464 = vpop.f32.mrb[0].mxu0
        %465 = vdwg.mxu0
        %vm466 = vcmp.gt.f32.partialorder %v388, 0.0
        %vm467 = vcmp.gt.f32.partialorder %v393, 0.0
        %vm468 = vcmp.gt.f32.partialorder %v398, 0.0
        %vm469 = vcmp.gt.f32.partialorder %v403, 0.0
        %vm470 = vcmp.gt.f32.partialorder %v408, 0.0
        %vm471 = vcmp.gt.f32.partialorder %v413, 0.0
        %vm472 = vcmp.gt.f32.partialorder %v418, 0.0
        %vm473 = vcmp.gt.f32.partialorder %v423, 0.0
        %vm474 = vcmp.gt.f32.partialorder %v428, 0.0
        %vm475 = vcmp.gt.f32.partialorder %v433, 0.0
        %vm476 = vcmp.gt.f32.partialorder %v438, 0.0
        %vm477 = vcmp.gt.f32.partialorder %v443, 0.0
        %vm478 = vcmp.gt.f32.partialorder %v448, 0.0
        %vm479 = vcmp.gt.f32.partialorder %v453, 0.0
        %vm480 = vcmp.gt.f32.partialorder %v458, 0.0
        %vm481 = vcmp.gt.f32.partialorder %v463, 0.0
        %v482 = vmul.f32 %v388, 0.01
        %v483 = vmul.f32 %v393, 0.01
        %v484 = vmul.f32 %v398, 0.01
        %v485 = vmul.f32 %v403, 0.01
        %v486 = vmul.f32 %v408, 0.01
        %v487 = vmul.f32 %v413, 0.01
        %v488 = vmul.f32 %v418, 0.01
        %v489 = vmul.f32 %v423, 0.01
        %v490 = vmul.f32 %v428, 0.01
        %v491 = vmul.f32 %v433, 0.01
        %v492 = vmul.f32 %v438, 0.01
        %v493 = vmul.f32 %v443, 0.01
        %v494 = vmul.f32 %v448, 0.01
        %v495 = vmul.f32 %v453, 0.01
        %v496 = vmul.f32 %v458, 0.01
        %v497 = vmul.f32 %v463, 0.01
        %v498 = vsel %vm466, %v388, %v482
        %v499 = vsel %vm467, %v393, %v483
        %v500 = vsel %vm468, %v398, %v484
        %v501 = vsel %vm469, %v403, %v485
        %v502 = vsel %vm470, %v408, %v486
        %v503 = vsel %vm471, %v413, %v487
        %v504 = vsel %vm472, %v418, %v488
        %v505 = vsel %vm473, %v423, %v489
        %v506 = vsel %vm474, %v428, %v490
        %v507 = vsel %vm475, %v433, %v491
        %v508 = vsel %vm476, %v438, %v492
        %v509 = vsel %vm477, %v443, %v493
        %v510 = vsel %vm478, %v448, %v494
        %v511 = vsel %vm479, %v453, %v495
        %v512 = vsel %vm480, %v458, %v496
        %v513 = vsel %vm481, %v463, %v497
        %v514 = vld [vmem:[%s3] sm:$0x1]
        %v516 = vlaneseq
        %v517 = vshrl.u32 %v516, 7
        %v518 = vsub.s32 0, %v517
        %v519 = vrot.slane %v514, %v518
        %v521 = vmul.f32 %v498, %v519
        %v522 = vmul.f32 %v499, %v519
        %v523 = vmul.f32 %v500, %v519
        %v524 = vmul.f32 %v501, %v519
        %v525 = vmul.f32 %v502, %v519
        %v526 = vmul.f32 %v503, %v519
        %v527 = vmul.f32 %v504, %v519
        %v528 = vmul.f32 %v505, %v519
        %v529 = vmul.f32 %v506, %v519
        %v530 = vmul.f32 %v507, %v519
        %v531 = vmul.f32 %v508, %v519
        %v532 = vmul.f32 %v509, %v519
        %v533 = vmul.f32 %v510, %v519
        %v534 = vmul.f32 %v511, %v519
        %v535 = vmul.f32 %v512, %v519
        %v536 = vmul.f32 %v513, %v519
        %vm537 = vcmask 523264
        %v538 = vsel %vm537, %v521, 0.0
        %539 = vadd.xlane.f32.xlu0 %v538
        %v540 = vpop.xlane.xlu0 %539
        %v541 = vsel %vm537, %v522, 0.0
        %542 = vadd.xlane.f32.xlu0 %v541
        %v543 = vpop.xlane.xlu0 %542
        %v544 = vsel %vm537, %v523, 0.0
        %545 = vadd.xlane.f32.xlu0 %v544
        %v546 = vpop.xlane.xlu0 %545
        %v547 = vsel %vm537, %v524, 0.0
        %548 = vadd.xlane.f32.xlu0 %v547
        %v549 = vpop.xlane.xlu0 %548
        %v550 = vsel %vm537, %v525, 0.0
        %551 = vadd.xlane.f32.xlu0 %v550
        %v552 = vpop.xlane.xlu0 %551
        %v553 = vsel %vm537, %v526, 0.0
        %554 = vadd.xlane.f32.xlu0 %v553
        %v555 = vpop.xlane.xlu0 %554
        %v556 = vsel %vm537, %v527, 0.0
        %557 = vadd.xlane.f32.xlu0 %v556
        %v558 = vpop.xlane.xlu0 %557
        %v559 = vsel %vm537, %v528, 0.0
        %560 = vadd.xlane.f32.xlu0 %v559
        %v561 = vpop.xlane.xlu0 %560
        %v562 = vsel %vm537, %v529, 0.0
        %563 = vadd.xlane.f32.xlu0 %v562
        %v564 = vpop.xlane.xlu0 %563
        %v565 = vsel %vm537, %v530, 0.0
        %566 = vadd.xlane.f32.xlu0 %v565
        %v567 = vpop.xlane.xlu0 %566
        %v568 = vsel %vm537, %v531, 0.0
        %569 = vadd.xlane.f32.xlu0 %v568
        %v570 = vpop.xlane.xlu0 %569
        %v571 = vsel %vm537, %v532, 0.0
        %572 = vadd.xlane.f32.xlu0 %v571
        %v573 = vpop.xlane.xlu0 %572
        %v574 = vsel %vm537, %v533, 0.0
        %575 = vadd.xlane.f32.xlu0 %v574
        %v576 = vpop.xlane.xlu0 %575
        %v577 = vsel %vm537, %v534, 0.0
        %578 = vadd.xlane.f32.xlu0 %v577
        %v579 = vpop.xlane.xlu0 %578
        %v580 = vsel %vm537, %v535, 0.0
        %581 = vadd.xlane.f32.xlu0 %v580
        %v582 = vpop.xlane.xlu0 %581
        %v583 = vsel %vm537, %v536, 0.0
        %584 = vadd.xlane.f32.xlu0 %v583
        %v585 = vpop.xlane.xlu0 %584
        %s586 = sld [smem:[#allocation2]]
        %v587 = vstv %s586
        %v588 = vadd.f32 %v540, %v587
        %v589 = vadd.f32 %v543, %v587
        %v590 = vadd.f32 %v546, %v587
        %v591 = vadd.f32 %v549, %v587
        %v592 = vadd.f32 %v552, %v587
        %v593 = vadd.f32 %v555, %v587
        %v594 = vadd.f32 %v558, %v587
        %v595 = vadd.f32 %v561, %v587
        %v596 = vadd.f32 %v564, %v587
        %v597 = vadd.f32 %v567, %v587
        %v598 = vadd.f32 %v570, %v587
        %v599 = vadd.f32 %v573, %v587
        %v600 = vadd.f32 %v576, %v587
        %v601 = vadd.f32 %v579, %v587
        %v602 = vadd.f32 %v582, %v587
        %v603 = vadd.f32 %v585, %v587
        %vm604 = vcmp.gt.f32.partialorder %v588, 0.0
        %vm605 = vcmp.gt.f32.partialorder %v589, 0.0
        %vm606 = vcmp.gt.f32.partialorder %v590, 0.0
        %vm607 = vcmp.gt.f32.partialorder %v591, 0.0
        %vm608 = vcmp.gt.f32.partialorder %v592, 0.0
        %vm609 = vcmp.gt.f32.partialorder %v593, 0.0
        %vm610 = vcmp.gt.f32.partialorder %v594, 0.0
        %vm611 = vcmp.gt.f32.partialorder %v595, 0.0
        %vm612 = vcmp.gt.f32.partialorder %v596, 0.0
        %vm613 = vcmp.gt.f32.partialorder %v597, 0.0
        %vm614 = vcmp.gt.f32.partialorder %v598, 0.0
        %vm615 = vcmp.gt.f32.partialorder %v599, 0.0
        %vm616 = vcmp.gt.f32.partialorder %v600, 0.0
        %vm617 = vcmp.gt.f32.partialorder %v601, 0.0
        %vm618 = vcmp.gt.f32.partialorder %v602, 0.0
        %vm619 = vcmp.gt.f32.partialorder %v603, 0.0
        %v620 = vmul.f32 %v588, 0.01
        %v621 = vmul.f32 %v589, 0.01
        %v622 = vmul.f32 %v590, 0.01
        %v623 = vmul.f32 %v591, 0.01
        %v624 = vmul.f32 %v592, 0.01
        %v625 = vmul.f32 %v593, 0.01
        %v626 = vmul.f32 %v594, 0.01
        %v627 = vmul.f32 %v595, 0.01
        %v628 = vmul.f32 %v596, 0.01
        %v629 = vmul.f32 %v597, 0.01
        %v630 = vmul.f32 %v598, 0.01
        %v631 = vmul.f32 %v599, 0.01
        %v632 = vmul.f32 %v600, 0.01
        %v633 = vmul.f32 %v601, 0.01
        %v634 = vmul.f32 %v602, 0.01
        %v635 = vmul.f32 %v603, 0.01
        %v636 = vsel %vm604, %v588, %v620
        %v637 = vsel %vm605, %v589, %v621
        %v638 = vsel %vm606, %v590, %v622
        %v639 = vsel %vm607, %v591, %v623
        %v640 = vsel %vm608, %v592, %v624
        %v641 = vsel %vm609, %v593, %v625
        %v642 = vsel %vm610, %v594, %v626
        %v643 = vsel %vm611, %v595, %v627
        %v644 = vsel %vm612, %v596, %v628
        %v645 = vsel %vm613, %v597, %v629
        %v646 = vsel %vm614, %v598, %v630
        %v647 = vsel %vm615, %v599, %v631
        %v648 = vsel %vm616, %v600, %v632
        %v649 = vsel %vm617, %v601, %v633
        %v650 = vsel %vm618, %v602, %v634
        %v651 = vsel %vm619, %v603, %v635
        %v668 = vlaneseq
        %v669 = vand.u32 %v668, 127
        %v670 = vlaneseq
        %v671 = vshrl.u32 %v670, 7
        %v672 = vsub.s32 %v669, %v671
        %v673 = vrot.slane %v636, %v672
        %v674 = vadd.s32 %v669, 4294967288
        %v675 = vlaneseq
        %v676 = vshrl.u32 %v675, 7
        %v677 = vsub.s32 %v674, %v676
        %v678 = vrot.slane %v637, %v677
        %vm679 = vcmask 130112
        %v680 = vsel %vm679, %v678, %v673
        %v681 = vadd.s32 %v669, 4294967280
        %v682 = vlaneseq
        %v683 = vshrl.u32 %v682, 7
        %v684 = vsub.s32 %v681, %v683
        %v685 = vrot.slane %v638, %v684
        %vm686 = vcmask 195712
        %v687 = vsel %vm686, %v685, %v680
        %v688 = vadd.s32 %v669, 4294967272
        %v689 = vlaneseq
        %v690 = vshrl.u32 %v689, 7
        %v691 = vsub.s32 %v688, %v690
        %v692 = vrot.slane %v639, %v691
        %vm693 = vcmask 261312
        %v694 = vsel %vm693, %v692, %v687
        %v695 = vadd.s32 %v669, 4294967264
        %v696 = vlaneseq
        %v697 = vshrl.u32 %v696, 7
        %v698 = vsub.s32 %v695, %v697
        %v699 = vrot.slane %v640, %v698
        %vm700 = vcmask 326912
        %v701 = vsel %vm700, %v699, %v694
        %v702 = vadd.s32 %v669, 4294967256
        %v703 = vlaneseq
        %v704 = vshrl.u32 %v703, 7
        %v705 = vsub.s32 %v702, %v704
        %v706 = vrot.slane %v641, %v705
        %vm707 = vcmask 392512
        %v708 = vsel %vm707, %v706, %v701
        %v709 = vadd.s32 %v669, 4294967248
        %v710 = vlaneseq
        %v711 = vshrl.u32 %v710, 7
        %v712 = vsub.s32 %v709, %v711
        %v713 = vrot.slane %v642, %v712
        %vm714 = vcmask 458112
        %v715 = vsel %vm714, %v713, %v708
        %v716 = vadd.s32 %v669, 4294967240
        %v717 = vlaneseq
        %v718 = vshrl.u32 %v717, 7
        %v719 = vsub.s32 %v716, %v718
        %v720 = vrot.slane %v643, %v719
        %vm721 = vcmask 523712
        %v722 = vsel %vm721, %v720, %v715
        %v723 = vadd.s32 %v669, 4294967232
        %v724 = vlaneseq
        %v725 = vshrl.u32 %v724, 7
        %v726 = vsub.s32 %v723, %v725
        %v727 = vrot.slane %v644, %v726
        %vm728 = vcmask 589312
        %v729 = vsel %vm728, %v727, %v722
        %v730 = vadd.s32 %v669, 4294967224
        %v731 = vlaneseq
        %v732 = vshrl.u32 %v731, 7
        %v733 = vsub.s32 %v730, %v732
        %v734 = vrot.slane %v645, %v733
        %vm735 = vcmask 654912
        %v736 = vsel %vm735, %v734, %v729
        %v737 = vadd.s32 %v669, 4294967216
        %v738 = vlaneseq
        %v739 = vshrl.u32 %v738, 7
        %v740 = vsub.s32 %v737, %v739
        %v741 = vrot.slane %v646, %v740
        %vm742 = vcmask 720512
        %v743 = vsel %vm742, %v741, %v736
        %v744 = vadd.s32 %v669, 4294967208
        %v745 = vlaneseq
        %v746 = vshrl.u32 %v745, 7
        %v747 = vsub.s32 %v744, %v746
        %v748 = vrot.slane %v647, %v747
        %vm749 = vcmask 786112
        %v750 = vsel %vm749, %v748, %v743
        %v751 = vadd.s32 %v669, 4294967200
        %v752 = vlaneseq
        %v753 = vshrl.u32 %v752, 7
        %v754 = vsub.s32 %v751, %v753
        %v755 = vrot.slane %v648, %v754
        %vm756 = vcmask 851712
        %v757 = vsel %vm756, %v755, %v750
        %v758 = vadd.s32 %v669, 4294967192
        %v759 = vlaneseq
        %v760 = vshrl.u32 %v759, 7
        %v761 = vsub.s32 %v758, %v760
        %v762 = vrot.slane %v649, %v761
        %vm763 = vcmask 917312
        %v764 = vsel %vm763, %v762, %v757
        %v765 = vadd.s32 %v669, 4294967184
        %v766 = vlaneseq
        %v767 = vshrl.u32 %v766, 7
        %v768 = vsub.s32 %v765, %v767
        %v769 = vrot.slane %v650, %v768
        %vm770 = vcmask 982912
        %v771 = vsel %vm770, %v769, %v764
        %v772 = vadd.s32 %v669, 4294967176
        %v773 = vlaneseq
        %v774 = vshrl.u32 %v773, 7
        %v775 = vsub.s32 %v772, %v774
        %v776 = vrot.slane %v651, %v775
        %vm777 = vcmask 1048512
        %v778 = vsel %vm777, %v776, %v771
        %780 = vst [vmem:[%s230] sm:$0x1] %v778
        %s781 = sand.u32 %s138, 1
        %s782 = scalar_lea.sflag [#allocation4], %s781
        %s783 = sand.u32 %s138, 1
        %s784 = scalar_lea.vmem [#allocation3], %s783
        // Predicated region
        $region41: #{tpu_custom_call.1} parent=39 // pred_check
          %p785 = pneg %p148
        $region42: #{tpu_custom_call.1} parent=39 // pred_check_branch
          %787 = sbr.rel (%p785) target = $region44
        $region43: #{tpu_custom_call.1} parent=39 // pred_region
          %s789 = ssub.s32 16, 16
          %790 = vsyncadd %s782, %s789
          %s791 = smul.addr %s20, 16
          %s792 = scalar_lea.hbm %s5, %s791
          %s794 = sshll.u32 %s784, 4
          %s795 = int_to_ptr.vmem [resolvable:$true] %s794
          %797 = dma.vmem_to_hbm [thread:$0]  %s795, 16, %s792, %s782
        $region44: #{tpu_custom_call.1} parent=39 // pred_fallthru
          _
      $region40: #{tpu_custom_call.1} parent=5 // pred_fallthru
        _
      %p798 = scmp.le.s32.totalorder 2, %s15
      // Predicated region
      $region45: #{tpu_custom_call.1} parent=5 // pred_check
        %p799 = pneg %p798
      $region46: #{tpu_custom_call.1} parent=5 // pred_check_branch
        %801 = sbr.rel (%p799) target = $region48
      $region47: #{tpu_custom_call.1} parent=5 // pred_region
        %s802 = ssub.s32 %s15, 2
        // Predicated region
        $region49: #{tpu_custom_call.1} parent=47 // pred_check
          %p803 = pneg %p154
        $region50: #{tpu_custom_call.1} parent=47 // pred_check_branch
          %805 = sbr.rel (%p803) target = $region52
        $region51: #{tpu_custom_call.1} parent=47 // pred_region
          %s806 = sand.u32 %s139, 1
          %s807 = scalar_lea.sflag [#allocation4], %s806
          %s808 = sand.u32 %s139, 1
          %s809 = scalar_lea.vmem [#allocation3], %s808
          %810 = dma.done %s807, 16
        $region52: #{tpu_custom_call.1} parent=47 // pred_fallthru
          _
      $region48: #{tpu_custom_call.1} parent=5 // pred_fallthru
        _
    $region6: #{tpu_custom_call.1} parent=1 // loop_footer
      %s19 = sadd.s32 1, %s15
    $region7: #{tpu_custom_call.1} parent=1 // loop_footer_branch
      %14 = sbr.rel target = $region3
    $region8: #{tpu_custom_call.1} parent=1 // loop_exit
      _
    %811 = vsyncpa [#allocation4], 1
    %s812 = scalar_lea.sflag [#allocation4], 1
    %813 = vsyncpa %s812, 1

</llo_original>
